<compile_context>
chip_gen: v7x
topology: tpu7x:2x2x1
jax: 0.10.0
libtpu: 0.0.40
codegen_flags: <defaults>
</compile_context>

<pallas_src>
import functools

import jax
import jax.numpy as jnp
from jax import lax
from jax.experimental import pallas as pl
from jax.experimental.pallas import tpu as pltpu


# Parity (dh, dw) ordering (dh-major); per parity bit, the original-image taps it uses.
_PARITIES = ((0, 0), (0, 1), (1, 0), (1, 1))
_OFFS = {0: (-1, 0), 1: (0, 1)}
# Which original 3x3 kernel rows (cols) collapse onto original-image offset dr for parity dh:
#   dh=0: up-rows {2h-1, 2h, 2h+1} -> orig rows {h-1, h, h}   (kh=0 -> -1; kh=1,2 -> 0)
#   dh=1: up-rows {2h, 2h+1, 2h+2} -> orig rows {h, h, h+1}   (kh=0,1 -> 0; kh=2 -> +1)
_TAPSET = {(0, -1): (0,), (0, 0): (1, 2), (1, 0): (0, 1), (1, 1): (2,)}
# Enumeration order of the 9 shifted views (must match weight column blocks).
_SHIFTS = tuple((dr, ds) for dr in (-1, 0, 1) for ds in (-1, 0, 1))

_MAX_TILE = 2048  # lanes per spatial tile (multiple of 128)


def _round_up(n, m):
    return ((n + m - 1) // m) * m


def _fused_big_weight(w):
    """w: (Cout, Cin, 3, 3) f32 -> (4*Cout, 9*Cin) fused weight.

    Row block p = parity (dh, dw) (dh-major); column block m = shift (dr, ds) in
    _SHIFTS order.  Blocks for taps a parity does not use are zero.
    """
    cout, cin = w.shape[0], w.shape[1]
    rows = []
    for dh, dw in _PARITIES:
        blocks = []
        for dr, ds in _SHIFTS:
            if dr in _OFFS[dh] and ds in _OFFS[dw]:
                kh = list(_TAPSET[(dh, dr)])
                kw = list(_TAPSET[(dw, ds)])
                blk = w[:, :, kh, :][:, :, :, kw].sum(axis=(2, 3))
            else:
                blk = jnp.zeros((cout, cin), w.dtype)
            blocks.append(blk)
        rows.append(jnp.concatenate(blocks, axis=1))   # (Cout, 9*Cin)
    return jnp.concatenate(rows, axis=0)               # (4*Cout, 9*Cin)


# ----------------------------------------------------------------------------
# Pallas kernel
# ----------------------------------------------------------------------------
def upsample_conv_kernel(x_ref, w_ref, b_ref, o_ref, *, offsets, tile):
    """One (batch, spatial-tile) grid step.

    x_ref: (Cin, tile_ext)   bf16 -- halo window of the flattened padded image.
    w_ref: (4*Cout, 9*Cin)   bf16 -- fused (parity x tap) weight matrix.
    b_ref: (4*Cout, 1)       f32  -- conv bias replicated per parity block.
    o_ref: (4*Cout, tile)    f32  -- parity-planar output tile (lane-dense).
    """
    # 9 shifted views (static, lane-misaligned slices) stacked along sublanes.
    rows = [x_ref[:, off:off + tile] for off in offsets]
    stacked = jnp.concatenate(rows, axis=0)                       # (9*Cin, tile) bf16
    acc = jnp.dot(w_ref[...], stacked,
                  preferred_element_type=jnp.float32)             # (4*Cout, tile) f32
    o_ref[...] = acc + b_ref[...]                                 # unmasked lane-dense store


# ----------------------------------------------------------------------------
# Wrapper
# ----------------------------------------------------------------------------
def upsample(x, params, *, use_conv=True, dims=2, operand_dtype=jnp.bfloat16):
    if dims != 2:
        # TODO(synk): dims==3 (3-D nearest interpolate of only H/W) not implemented.
        raise NotImplementedError("only dims=2 is implemented")
    if not use_conv:
        # TODO(synk): use_conv=False (pure nearest upsample, no conv) not implemented.
        raise NotImplementedError("only use_conv=True is implemented")

    B, C, H, W = x.shape
    w = params["w"]                      # (Cout, Cin, 3, 3)
    b = params["b"]                      # (Cout,)
    Cout = w.shape[0]
    assert w.shape[1] == C

    wp = W + 2
    hp = H + 2
    halo = wp + 1                        # local index of original pixel (0,0) in a window

    # Spatial tiling of the flattened (H, W+2) output domain.
    nv = H * wp
    tile = min(_round_up(nv, 128), _MAX_TILE)
    nvr = _round_up(nv, tile)
    nt = nvr // tile
    tile_ext = _round_up(tile + 2 * halo, 128)     # lane-aligned halo window width
    flat_len = (nt - 1) * tile + tile_ext

    # bf16 in the wrapper: pad spatially by 1, flatten row-major, zero tail, then
    # build overlapping halo windows (only duplicates the small halo fraction;
    # for nt == 1 this is a pure reshape).
    x_zp = jnp.pad(x.astype(operand_dtype), ((0, 0), (0, 0), (1, 1), (1, 1)))
    x_flat = x_zp.reshape(B, C, hp * wp)
    x_flat = jnp.pad(x_flat, ((0, 0), (0, 0), (0, flat_len - hp * wp)))
    x_tiles = jnp.stack(
        [x_flat[:, :, j * tile: j * tile + tile_ext] for j in range(nt)], axis=2
    )                                               # (B, C, nt, tile_ext)

    w_big = _fused_big_weight(w.astype(jnp.float32)).astype(operand_dtype)  # (4Cout, 9C)
    b_big = jnp.tile(b.astype(jnp.float32), 4).reshape(4 * Cout, 1)         # (4Cout, 1)

    # Static in-window offsets of the 9 shifted views (same order as w_big columns).
    offsets = tuple(halo + dr * wp + ds for dr, ds in _SHIFTS)

    kernel = functools.partial(upsample_conv_kernel, offsets=offsets, tile=tile)

    # VMEM budget (double-buffered blocks + in-kernel temporaries), with headroom.
    isz = jnp.dtype(operand_dtype).itemsize
    in_blk = C * tile_ext * isz
    out_blk = 4 * Cout * tile * 4
    w_bytes = 4 * Cout * 9 * C * isz + 4 * Cout * 4
    scratch = 2 * (9 * C * tile * isz) + 2 * out_blk
    est = 2 * (in_blk + out_blk + w_bytes) + scratch
    vmem_limit = int(min(max(4 * est, 32 << 20), 60 << 20))

    out_flat = pl.pallas_call(
        kernel,
        out_shape=jax.ShapeDtypeStruct((B, 4 * Cout, nvr), jnp.float32),
        grid_spec=pltpu.PrefetchScalarGridSpec(
            num_scalar_prefetch=0,
            grid=(B, nt),
            in_specs=[
                pl.BlockSpec((None, C, None, tile_ext), lambda bb, jt: (bb, 0, jt, 0)),
                pl.BlockSpec((4 * Cout, 9 * C), lambda bb, jt: (0, 0)),
                pl.BlockSpec((4 * Cout, 1), lambda bb, jt: (0, 0)),
            ],
            out_specs=pl.BlockSpec((None, 4 * Cout, tile), lambda bb, jt: (bb, 0, jt)),
        ),
        compiler_params=pltpu.CompilerParams(
            dimension_semantics=("parallel", "parallel"),
            vmem_limit_bytes=vmem_limit,
        ),
    )(x_tiles, w_big, b_big)

    # Layout plumbing (outside the kernel): drop flat-domain pad columns and
    # interleave the 4 parity planes into (B, Cout, 2H, 2W).  Skip this if the
    # consumer can take the parity-planar slab directly.
    y = out_flat[:, :, : H * wp].reshape(B, 2, 2, Cout, H, wp)[..., :W]
    y = jnp.transpose(y, (0, 3, 4, 1, 5, 2)).reshape(B, Cout, 2 * H, 2 * W)
    return y


# ----------------------------------------------------------------------------
# Pure-JAX reference (matches the PyTorch forward semantics)
# ----------------------------------------------------------------------------
def upsample_ref(x, w, b):
    xu = jnp.repeat(jnp.repeat(x, 2, axis=2), 2, axis=3)        # nearest 2x
    y = lax.conv_general_dilated(
        xu.astype(jnp.float32), w.astype(jnp.float32),
        window_strides=(1, 1), padding=((1, 1), (1, 1)),
        dimension_numbers=("NCHW", "OIHW", "NCHW"))
    return y + b[None, :, None, None]


# ----------------------------------------------------------------------------
# Main
# ----------------------------------------------------------------------------
if __name__ == "__main__":
    B, C, H, W = 2, 8, 16, 16
    Cout = 8                             # out_channels=None -> channels

    key = jax.random.PRNGKey(0)
    kx, kw, kb = jax.random.split(key, 3)
    x = jax.random.normal(kx, (B, C, H, W), jnp.float32)
    params = {
        "w": 0.1 * jax.random.normal(kw, (Cout, C, 3, 3), jnp.float32),
        "b": 0.1 * jax.random.normal(kb, (Cout,), jnp.float32),
    }

    out = upsample(x, params, use_conv=True, dims=2)
    out = jax.block_until_ready(out)

    ref = upsample_ref(x, params["w"], params["b"])
    ref = jax.block_until_ready(ref)

    assert out.shape == (B, Cout, 2 * H, 2 * W)
    max_err = float(jnp.max(jnp.abs(out - ref)))
    assert jnp.allclose(out, ref, atol=2e-2, rtol=2e-2), f"max abs err = {max_err}"
    print("KERNEL_OK")
</pallas_src>

<mosaic_0001>
module attributes {stable_mosaic.version = 11 : i64} {
  func.func @upsample_conv_kernel(%arg0: i32, %arg1: i32, %arg2: memref<1x8x1x512xbf16, #tpu.memory_space<vmem>>, %arg3: memref<32x72xbf16, #tpu.memory_space<vmem>>, %arg4: memref<32x1xf32, #tpu.memory_space<vmem>>, %arg5: memref<1x32x384xf32, #tpu.memory_space<vmem>>) attributes {dimension_semantics = [#tpu.dimension_semantics<parallel>, #tpu.dimension_semantics<parallel>], iteration_bounds = array<i64: 2, 1>, scalar_prefetch = 0 : i64, scratch_operands = 0 : i64, tpu.core_type = #tpu.core_type<tc>, window_params = [{transform_indices = @transform_0, window_bounds = array<i64: 1, 8, 1, 512>}, {pipeline_mode = #tpu.pipeline_mode<synchronous>, transform_indices = @transform_1, window_bounds = array<i64: 32, 72>}, {pipeline_mode = #tpu.pipeline_mode<synchronous>, transform_indices = @transform_2, window_bounds = array<i64: 32, 1>}, {transform_indices = @transform_3, window_bounds = array<i64: 1, 32, 384>}]} {
    %c0 = arith.constant 0 : index
    %c0_0 = arith.constant 0 : index
    %c0_1 = arith.constant 0 : index
    %c0_2 = arith.constant 0 : index
    %0 = vector.load %arg2[%c0, %c0_0, %c0_1, %c0_2] : memref<1x8x1x512xbf16, #tpu.memory_space<vmem>>, vector<1x8x1x384xbf16>
    %1 = vector.shape_cast %0 : vector<1x8x1x384xbf16> to vector<8x384xbf16>
    %c0_3 = arith.constant 0 : index
    %c0_4 = arith.constant 0 : index
    %c0_5 = arith.constant 0 : index
    %c1 = arith.constant 1 : index
    %2 = vector.load %arg2[%c0_3, %c0_4, %c0_5, %c1] : memref<1x8x1x512xbf16, #tpu.memory_space<vmem>>, vector<1x8x1x384xbf16>
    %3 = vector.shape_cast %2 : vector<1x8x1x384xbf16> to vector<8x384xbf16>
    %c0_6 = arith.constant 0 : index
    %c0_7 = arith.constant 0 : index
    %c0_8 = arith.constant 0 : index
    %c2 = arith.constant 2 : index
    %4 = vector.load %arg2[%c0_6, %c0_7, %c0_8, %c2] : memref<1x8x1x512xbf16, #tpu.memory_space<vmem>>, vector<1x8x1x384xbf16>
    %5 = vector.shape_cast %4 : vector<1x8x1x384xbf16> to vector<8x384xbf16>
    %c0_9 = arith.constant 0 : index
    %c0_10 = arith.constant 0 : index
    %c0_11 = arith.constant 0 : index
    %c18 = arith.constant 18 : index
    %6 = vector.load %arg2[%c0_9, %c0_10, %c0_11, %c18] : memref<1x8x1x512xbf16, #tpu.memory_space<vmem>>, vector<1x8x1x384xbf16>
    %7 = vector.shape_cast %6 : vector<1x8x1x384xbf16> to vector<8x384xbf16>
    %c0_12 = arith.constant 0 : index
    %c0_13 = arith.constant 0 : index
    %c0_14 = arith.constant 0 : index
    %c19 = arith.constant 19 : index
    %8 = vector.load %arg2[%c0_12, %c0_13, %c0_14, %c19] : memref<1x8x1x512xbf16, #tpu.memory_space<vmem>>, vector<1x8x1x384xbf16>
    %9 = vector.shape_cast %8 : vector<1x8x1x384xbf16> to vector<8x384xbf16>
    %c0_15 = arith.constant 0 : index
    %c0_16 = arith.constant 0 : index
    %c0_17 = arith.constant 0 : index
    %c20 = arith.constant 20 : index
    %10 = vector.load %arg2[%c0_15, %c0_16, %c0_17, %c20] : memref<1x8x1x512xbf16, #tpu.memory_space<vmem>>, vector<1x8x1x384xbf16>
    %11 = vector.shape_cast %10 : vector<1x8x1x384xbf16> to vector<8x384xbf16>
    %c0_18 = arith.constant 0 : index
    %c0_19 = arith.constant 0 : index
    %c0_20 = arith.constant 0 : index
    %c36 = arith.constant 36 : index
    %12 = vector.load %arg2[%c0_18, %c0_19, %c0_20, %c36] : memref<1x8x1x512xbf16, #tpu.memory_space<vmem>>, vector<1x8x1x384xbf16>
    %13 = vector.shape_cast %12 : vector<1x8x1x384xbf16> to vector<8x384xbf16>
    %c0_21 = arith.constant 0 : index
    %c0_22 = arith.constant 0 : index
    %c0_23 = arith.constant 0 : index
    %c37 = arith.constant 37 : index
    %14 = vector.load %arg2[%c0_21, %c0_22, %c0_23, %c37] : memref<1x8x1x512xbf16, #tpu.memory_space<vmem>>, vector<1x8x1x384xbf16>
    %15 = vector.shape_cast %14 : vector<1x8x1x384xbf16> to vector<8x384xbf16>
    %c0_24 = arith.constant 0 : index
    %c0_25 = arith.constant 0 : index
    %c0_26 = arith.constant 0 : index
    %c38 = arith.constant 38 : index
    %16 = vector.load %arg2[%c0_24, %c0_25, %c0_26, %c38] : memref<1x8x1x512xbf16, #tpu.memory_space<vmem>>, vector<1x8x1x384xbf16>
    %17 = vector.shape_cast %16 : vector<1x8x1x384xbf16> to vector<8x384xbf16>
    %18 = tpu.concatenate %1, %3, %5, %7, %9, %11, %13, %15, %17 in 0 : vector<8x384xbf16>, vector<8x384xbf16>, vector<8x384xbf16>, vector<8x384xbf16>, vector<8x384xbf16>, vector<8x384xbf16>, vector<8x384xbf16>, vector<8x384xbf16>, vector<8x384xbf16> -> vector<72x384xbf16>
    %c0_27 = arith.constant 0 : index
    %c0_28 = arith.constant 0 : index
    %19 = vector.load %arg3[%c0_27, %c0_28] : memref<32x72xbf16, #tpu.memory_space<vmem>>, vector<32x72xbf16>
    %cst = arith.constant dense<0.000000e+00> : vector<32x384xf32>
    %20 = tpu.matmul %19, %18, %cst {dimension_numbers = #tpu.dot_dimension_numbers<[1], [0], [0], [1], [0, 0, 1, 1], [], []>} : vector<32x72xbf16>, vector<72x384xbf16>, vector<32x384xf32> -> vector<32x384xf32>
    %c0_29 = arith.constant 0 : index
    %c0_30 = arith.constant 0 : index
    %21 = vector.load %arg4[%c0_29, %c0_30] : memref<32x1xf32, #tpu.memory_space<vmem>>, vector<32x1xf32>
    %22 = vector.broadcast %21 : vector<32x1xf32> to vector<32x384xf32>
    %23 = arith.addf %20, %22 : vector<32x384xf32>
    %c0_31 = arith.constant 0 : index
    %c0_32 = arith.constant 0 : index
    %c0_33 = arith.constant 0 : index
    %24 = vector.load %arg5[%c0_31, %c0_32, %c0_33] : memref<1x32x384xf32, #tpu.memory_space<vmem>>, vector<1x32x384xf32>
    %25 = vector.shape_cast %24 : vector<1x32x384xf32> to vector<32x384xf32>
    %26 = vector.shape_cast %23 : vector<32x384xf32> to vector<1x32x384xf32>
    tpu.vector_store %arg5[%c0_31, %c0_32, %c0_33], %26 {strides = array<i32>} : memref<1x32x384xf32, #tpu.memory_space<vmem>>, vector<1x32x384xf32>,
    return
  }
  func.func @transform_0(%arg0: i32, %arg1: i32) -> (i32, i32, i32, i32) {
    %c0_i32 = arith.constant 0 : i32
    %c0_i32_0 = arith.constant 0 : i32
    %c0_i32_1 = arith.constant 0 : i32
    return %arg0, %c0_i32, %arg1, %c0_i32_0 : i32, i32, i32, i32
  }
  func.func @transform_1(%arg0: i32, %arg1: i32) -> (i32, i32) {
    %c0_i32 = arith.constant 0 : i32
    %c0_i32_0 = arith.constant 0 : i32
    %c0_i32_1 = arith.constant 0 : i32
    return %c0_i32, %c0_i32_0 : i32, i32
  }
  func.func @transform_2(%arg0: i32, %arg1: i32) -> (i32, i32) {
    %c0_i32 = arith.constant 0 : i32
    %c0_i32_0 = arith.constant 0 : i32
    %c0_i32_1 = arith.constant 0 : i32
    return %c0_i32, %c0_i32_0 : i32, i32
  }
  func.func @transform_3(%arg0: i32, %arg1: i32) -> (i32, i32, i32) {
    %c0_i32 = arith.constant 0 : i32
    %c0_i32_0 = arith.constant 0 : i32
    return %arg0, %c0_i32, %arg1 : i32, i32, i32
  }
}

</mosaic_0001>

<llo_original>
// kernel: tpu_custom_call.1
$region0: #{tpu_custom_call.1}
  #allocation0 [shape = 'u32[]', space=smem, size = 0x4, offset = 0x4, fixed_abs, tag = 'smem constant byte address 0x4 - core index']
  #allocation1 [shape = 'u32[144,128]{1,0:T(1,128)}', space=vmem, size = 0x12000, scoped, tag = 'internal scratch']
  %s0 = inlined_call_operand.vmem [shape: bf16[2,8,1,512], index: 0, kind: input, shape index: {}]
  %s1 = inlined_call_operand.vmem [shape: bf16[32,72], index: 1, kind: input, shape index: {}]
  %s2 = inlined_call_operand.vmem [shape: f32[32,1], index: 2, kind: input, shape index: {}]
  %s3 = inlined_call_operand.hbm [shape: f32[2,32,384], index: 3, kind: output, shape index: {}]
  %s4 = sld [smem:[#allocation0]]
  $region45: #{tpu_custom_call.1} parent=0
    _
  %s6 = ssub.s32 1, %s4
  %s7 = scalar_select 0, %s6, %s4
  $region1: #{tpu_custom_call.1} parent=0
    #allocation2 [shape = 'u8[98304]{0}', space=vmem, size = 0x18000, scoped, tag = 'output window, operand 0']
    #allocation3 [shape = 's32[2]{0}', space=sflag, size = 0x8, scoped, tag = 'scoped memory for tpu_custom_call.1']
    %8 = vsyncpa [#allocation3], 0
    %s9 = scalar_lea.sflag [#allocation3], 1
    %10 = vsyncpa %s9, 0
    loop: start=0, step=1, limit=4
    $region2: #{tpu_custom_call.1} parent=1 // loop_pre_header
      _
    $region3: #{tpu_custom_call.1} parent=1 // loop_header
      %s12 = sphi 0, %s16
      %p13 = scmp.ge.s32.totalorder %s12, 4
      %s19 = sphi 0, %s31
      %s20 = sphi 0, %s27
      %s21 = sphi 0, %s19
      %s22 = sphi 0, %s20
      %s23 = sphi 0, %s21
      %s24 = sphi 0, %s22
      %s36 = sphi 0, %s38
      %s39 = sphi 0, %s36
      %s40 = sphi 0, %s39
      %s56 = sphi 0, %s40
      %s60 = sphi 0, %s60
      %s62 = sphi 0, %s60
      %s63 = sphi 0, %s62
      %s77 = sphi 0, %s63
      %s81 = sphi 0, %s81
      %s83 = sphi 0, %s81
      %s84 = sphi 0, %s83
      %s98 = sphi 0, %s84
      %s106 = sphi 0, %s108
      %s109 = sphi 0, %s106
      %s110 = sphi 0, %s109
      %s126 = sphi 0, %s110
    $region4: #{tpu_custom_call.1} parent=1 // loop_header_branch
      %15 = sbr.rel (%p13) target = $region8
    $region5: #{tpu_custom_call.1} parent=1 // loop_body
      %s17 = ssub.s32 %s12, 1
      %s18 = ssub.s32 %s12, 2
      %s25 = sadd.s32 1, %s20
      %p26 = scmp.ge.s32.totalorder %s25, 1
      %s27 = scalar_select %p26, 0, %s25
      %s28 = sadd.s32 1, %s19
      %s29 = scalar_select %p26, %s28, %s19
      %p30 = scmp.ge.s32.totalorder %s29, 2
      %s31 = scalar_select %p30, 0, %s29
      %s32 = ssub.s32 %s19, %s31
      %s33 = ssub.s32 %s20, %s27
      %s34 = sor.u32 %s32, %s33
      %p35 = scmp.eq.s32.totalorder %s34, 0
      %s37 = sadd.s32 %s36, 1
      %s38 = scalar_select %p35, %s36, %s37
      %p41 = pneg %p35
      %p42 = scmp.eq.s32.totalorder %s12, 1
      %p43 = por %p41, %p42
      %p44 = scmp.ne.s32.totalorder %s36, %s39
      %p45 = scmp.eq.s32.totalorder %s12, 0
      %p46 = por %p44, %p45
      %p47 = scmp.ne.s32.totalorder %s36, %s39
      %p48 = scmp.eq.s32.totalorder %s17, 1
      %p49 = por %p47, %p48
      %p50 = scmp.ne.s32.totalorder %s39, %s40
      %p51 = scmp.eq.s32.totalorder %s17, 0
      %p52 = por %p50, %p51
      %p53 = scmp.ne.s32.totalorder %s39, %s40
      %p54 = scmp.eq.s32.totalorder %s18, 1
      %p55 = por %p53, %p54
      %p57 = scmp.ne.s32.totalorder %s40, %s56
      %p58 = scmp.eq.s32.totalorder %s18, 0
      %p59 = por %p57, %p58
      %s61 = sadd.s32 %s60, 1
      %p64 = scmp.eq.s32.totalorder %s12, 1
      %p65 = scmp.ne.s32.totalorder %s60, %s62
      %p66 = scmp.eq.s32.totalorder %s12, 0
      %p67 = por %p65, %p66
      %p68 = scmp.ne.s32.totalorder %s60, %s62
      %p69 = scmp.eq.s32.totalorder %s17, 1
      %p70 = por %p68, %p69
      %p71 = scmp.ne.s32.totalorder %s62, %s63
      %p72 = scmp.eq.s32.totalorder %s17, 0
      %p73 = por %p71, %p72
      %p74 = scmp.ne.s32.totalorder %s62, %s63
      %p75 = scmp.eq.s32.totalorder %s18, 1
      %p76 = por %p74, %p75
      %p78 = scmp.ne.s32.totalorder %s63, %s77
      %p79 = scmp.eq.s32.totalorder %s18, 0
      %p80 = por %p78, %p79
      %s82 = sadd.s32 %s81, 1
      %p85 = scmp.eq.s32.totalorder %s12, 1
      %p86 = scmp.ne.s32.totalorder %s81, %s83
      %p87 = scmp.eq.s32.totalorder %s12, 0
      %p88 = por %p86, %p87
      %p89 = scmp.ne.s32.totalorder %s81, %s83
      %p90 = scmp.eq.s32.totalorder %s17, 1
      %p91 = por %p89, %p90
      %p92 = scmp.ne.s32.totalorder %s83, %s84
      %p93 = scmp.eq.s32.totalorder %s17, 0
      %p94 = por %p92, %p93
      %p95 = scmp.ne.s32.totalorder %s83, %s84
      %p96 = scmp.eq.s32.totalorder %s18, 1
      %p97 = por %p95, %p96
      %p99 = scmp.ne.s32.totalorder %s84, %s98
      %p100 = scmp.eq.s32.totalorder %s18, 0
      %p101 = por %p99, %p100
      %s102 = ssub.s32 %s19, %s31
      %s103 = ssub.s32 %s20, %s27
      %s104 = sor.u32 %s102, %s103
      %p105 = scmp.eq.s32.totalorder %s104, 0
      %s107 = sadd.s32 %s106, 1
      %s108 = scalar_select %p105, %s106, %s107
      %p111 = pneg %p105
      %p112 = scmp.eq.s32.totalorder %s12, 1
      %p113 = por %p111, %p112
      %p114 = scmp.ne.s32.totalorder %s106, %s109
      %p115 = scmp.eq.s32.totalorder %s12, 0
      %p116 = por %p114, %p115
      %p117 = scmp.ne.s32.totalorder %s106, %s109
      %p118 = scmp.eq.s32.totalorder %s17, 1
      %p119 = por %p117, %p118
      %p120 = scmp.ne.s32.totalorder %s109, %s110
      %p121 = scmp.eq.s32.totalorder %s17, 0
      %p122 = por %p120, %p121
      %p123 = scmp.ne.s32.totalorder %s109, %s110
      %p124 = scmp.eq.s32.totalorder %s18, 1
      %p125 = por %p123, %p124
      %p127 = scmp.ne.s32.totalorder %s110, %s126
      %p128 = scmp.eq.s32.totalorder %s18, 0
      %p129 = por %p127, %p128
      %p130 = scmp.le.s32.totalorder 1, %s12
      %p131 = scmp.lt.s32.totalorder %s12, 3
      %p132 = pnand %p130, %p131
      %p133 = pneg %p132
      // Predicated region
      $region9: #{tpu_custom_call.1} parent=5 // pred_check
        _
      $region10: #{tpu_custom_call.1} parent=5 // pred_check_branch
        %135 = sbr.rel (%p132) target = $region12
      $region11: #{tpu_custom_call.1} parent=5 // pred_region
        %s136 = ssub.s32 %s12, 1
        // Predicated region
        $region13: #{tpu_custom_call.1} parent=11 // pred_check
          %p137 = pneg %p73
        $region14: #{tpu_custom_call.1} parent=11 // pred_check_branch
          %139 = sbr.rel (%p137) target = $region16
        $region15: #{tpu_custom_call.1} parent=11 // pred_region
          _
        $region16: #{tpu_custom_call.1} parent=11 // pred_fallthru
          _
        // Predicated region
        $region17: #{tpu_custom_call.1} parent=11 // pred_check
          %p140 = pneg %p94
        $region18: #{tpu_custom_call.1} parent=11 // pred_check_branch
          %142 = sbr.rel (%p140) target = $region20
        $region19: #{tpu_custom_call.1} parent=11 // pred_region
          _
        $region20: #{tpu_custom_call.1} parent=11 // pred_fallthru
          _
      $region12: #{tpu_custom_call.1} parent=5 // pred_fallthru
        _
      %p143 = scmp.lt.s32.totalorder %s12, 2
      // Predicated region
      $region21: #{tpu_custom_call.1} parent=5 // pred_check
        %p144 = pneg %p143
      $region22: #{tpu_custom_call.1} parent=5 // pred_check_branch
        %146 = sbr.rel (%p144) target = $region24
      $region23: #{tpu_custom_call.1} parent=5 // pred_region
        // Predicated region
        $region25: #{tpu_custom_call.1} parent=23 // pred_check
          %p147 = pneg %p46
        $region26: #{tpu_custom_call.1} parent=23 // pred_check_branch
          %149 = sbr.rel (%p147) target = $region28
        $region27: #{tpu_custom_call.1} parent=23 // pred_region
          %p150 = scmp.lt.s32.totalorder %s19, 1
          %s151 = scalar_select %p150, %s19, 1
          %p152 = scmp.lt.s32.totalorder %s20, 0
          %s153 = scalar_select %p152, %s20, 0
          %s154 = smul.addr %s153, 4
          %s155 = smul.addr %s151, 32
          %s156 = sadd.s32 %s154, %s155
          %s157 = scalar_lea.vmem %s0, %s156
        $region28: #{tpu_custom_call.1} parent=23 // pred_fallthru
          _
      $region24: #{tpu_custom_call.1} parent=5 // pred_fallthru
        _
      %p158 = scmp.le.s32.totalorder 1, %s12
      %p159 = scmp.lt.s32.totalorder %s12, 3
      %p160 = pnand %p158, %p159
      %p161 = pneg %p160
      // Predicated region
      $region29: #{tpu_custom_call.1} parent=5 // pred_check
        _
      $region30: #{tpu_custom_call.1} parent=5 // pred_check_branch
        %163 = sbr.rel (%p160) target = $region32
      $region31: #{tpu_custom_call.1} parent=5 // pred_region
        %s164 = ssub.s32 %s12, 1
        %p165 = scmp.lt.s32.totalorder %s21, 1
        %s166 = scalar_select %p165, %s21, 1
        %p167 = scmp.lt.s32.totalorder %s22, 0
        %s168 = scalar_select %p167, %s22, 0
        %s169 = smul.addr %s168, 4
        %s170 = smul.addr %s166, 32
        %s171 = sadd.s32 %s169, %s170
        %s172 = scalar_lea.vmem %s0, %s171
        %p173 = pneg %p52
        %p174 = pneg %p49
        %p175 = pneg %p73
        %p176 = pneg %p70
        %p177 = pneg %p94
        %p178 = pneg %p91
        %p179 = pneg %p122
        %p180 = pneg %p119
        %s181 = sand.u32 %s109, 1
        %s182 = scalar_lea.sflag [#allocation3], %s181
        %s183 = sand.u32 %s109, 1
        %s184 = smul.addr %s183, 96
        %s185 = scalar_lea.vmem [#allocation2], %s184
        %p186 = scmp.lt.s32.totalorder %s21, 1
        %s187 = scalar_select %p186, %s21, 1
        %p188 = scmp.lt.s32.totalorder %s22, 0
        %s189 = scalar_select %p188, %s22, 0
        %s190 = smul.addr %s189, 4
        %s191 = smul.addr %s187, 32
        %s192 = sadd.s32 %s190, %s191
        %s193 = scalar_lea.vmem %s0, %s192
        %s194 = smul.u32 3, %s22
        %v196 = vld [vmem:[%s193] sm:$0x7]
        %v197 = vld [vmem:[%s193 + $0x4] sm:$0x7]
        %v198 = vld [vmem:[%s193 + $0x8] sm:$0x7]
        %v199 = vld [vmem:[%s193 + $0xc] sm:$0x7]
        %v200 = vld [vmem:[%s193 + $0x10] sm:$0x7]
        %v201 = vld [vmem:[%s193 + $0x14] sm:$0x7]
        %v202 = vld [vmem:[%s193 + $0x18] sm:$0x7]
        %v203 = vld [vmem:[%s193 + $0x1c] sm:$0x7]
        %v204 = vld [vmem:[%s193] sm:$0xf]
        %v205 = vld [vmem:[%s193 + $0x4] sm:$0xf]
        %v206 = vld [vmem:[%s193 + $0x8] sm:$0xf]
        %v207 = vld [vmem:[%s193 + $0xc] sm:$0xf]
        %v208 = vld [vmem:[%s193 + $0x10] sm:$0xf]
        %v209 = vld [vmem:[%s193 + $0x14] sm:$0xf]
        %v210 = vld [vmem:[%s193 + $0x18] sm:$0xf]
        %v211 = vld [vmem:[%s193 + $0x1c] sm:$0xf]
        %v221 = vunpack.c.l.s4 1966171168
        %v222 = vunpack.c.0.s8 %v221
        %v223 = vlaneseq
        %v224 = vshrl.u32 %v223, 7
        %v225 = vsub.s32 %v222, %v224
        %v226 = vrot.slane %v196, %v225
        %v227 = vcombine.high %v226, %v226
        %v229 = vunpack.c.l.s4 1966171168
        %v230 = vunpack.c.0.s8 %v229
        %v231 = vlaneseq
        %v232 = vshrl.u32 %v231, 7
        %v233 = vsub.s32 %v230, %v232
        %v234 = vrot.slane %v226, %v233
        %v236 = vunpack.c.l.s4 1966171168
        %v237 = vunpack.c.0.s8 %v236
        %v238 = vlaneseq
        %v239 = vshrl.u32 %v238, 7
        %v240 = vsub.s32 %v237, %v239
        %v241 = vrot.slane %v227, %v240
        %v242 = vcombine.high %v234, %v234
        %v244 = vunpack.c.l.s4 1966171168
        %v245 = vunpack.c.0.s8 %v244
        %v246 = vlaneseq
        %v247 = vshrl.u32 %v246, 7
        %v248 = vsub.s32 %v245, %v247
        %v249 = vrot.slane %v197, %v248
        %v250 = vcombine.high %v249, %v249
        %v252 = vunpack.c.l.s4 1966171168
        %v253 = vunpack.c.0.s8 %v252
        %v254 = vlaneseq
        %v255 = vshrl.u32 %v254, 7
        %v256 = vsub.s32 %v253, %v255
        %v257 = vrot.slane %v249, %v256
        %v259 = vunpack.c.l.s4 1966171168
        %v260 = vunpack.c.0.s8 %v259
        %v261 = vlaneseq
        %v262 = vshrl.u32 %v261, 7
        %v263 = vsub.s32 %v260, %v262
        %v264 = vrot.slane %v250, %v263
        %v265 = vcombine.high %v257, %v257
        %v267 = vunpack.c.l.s4 1966171168
        %v268 = vunpack.c.0.s8 %v267
        %v269 = vlaneseq
        %v270 = vshrl.u32 %v269, 7
        %v271 = vsub.s32 %v268, %v270
        %v272 = vrot.slane %v198, %v271
        %v273 = vcombine.high %v272, %v272
        %v275 = vunpack.c.l.s4 1966171168
        %v276 = vunpack.c.0.s8 %v275
        %v277 = vlaneseq
        %v278 = vshrl.u32 %v277, 7
        %v279 = vsub.s32 %v276, %v278
        %v280 = vrot.slane %v272, %v279
        %v282 = vunpack.c.l.s4 1966171168
        %v283 = vunpack.c.0.s8 %v282
        %v284 = vlaneseq
        %v285 = vshrl.u32 %v284, 7
        %v286 = vsub.s32 %v283, %v285
        %v287 = vrot.slane %v273, %v286
        %v288 = vcombine.high %v280, %v280
        %v290 = vunpack.c.l.s4 1966171168
        %v291 = vunpack.c.0.s8 %v290
        %v292 = vlaneseq
        %v293 = vshrl.u32 %v292, 7
        %v294 = vsub.s32 %v291, %v293
        %v295 = vrot.slane %v199, %v294
        %v296 = vcombine.high %v295, %v295
        %v298 = vunpack.c.l.s4 1966171168
        %v299 = vunpack.c.0.s8 %v298
        %v300 = vlaneseq
        %v301 = vshrl.u32 %v300, 7
        %v302 = vsub.s32 %v299, %v301
        %v303 = vrot.slane %v295, %v302
        %v305 = vunpack.c.l.s4 1966171168
        %v306 = vunpack.c.0.s8 %v305
        %v307 = vlaneseq
        %v308 = vshrl.u32 %v307, 7
        %v309 = vsub.s32 %v306, %v308
        %v310 = vrot.slane %v296, %v309
        %v311 = vcombine.high %v303, %v303
        %v313 = vunpack.c.l.s4 1966171168
        %v314 = vunpack.c.0.s8 %v313
        %v315 = vlaneseq
        %v316 = vshrl.u32 %v315, 7
        %v317 = vsub.s32 %v314, %v316
        %v318 = vrot.slane %v200, %v317
        %v319 = vcombine.high %v318, %v318
        %v321 = vunpack.c.l.s4 1966171168
        %v322 = vunpack.c.0.s8 %v321
        %v323 = vlaneseq
        %v324 = vshrl.u32 %v323, 7
        %v325 = vsub.s32 %v322, %v324
        %v326 = vrot.slane %v318, %v325
        %v328 = vunpack.c.l.s4 1966171168
        %v329 = vunpack.c.0.s8 %v328
        %v330 = vlaneseq
        %v331 = vshrl.u32 %v330, 7
        %v332 = vsub.s32 %v329, %v331
        %v333 = vrot.slane %v319, %v332
        %v334 = vcombine.high %v326, %v326
        %v336 = vunpack.c.l.s4 1966171168
        %v337 = vunpack.c.0.s8 %v336
        %v338 = vlaneseq
        %v339 = vshrl.u32 %v338, 7
        %v340 = vsub.s32 %v337, %v339
        %v341 = vrot.slane %v201, %v340
        %v342 = vcombine.high %v341, %v341
        %v344 = vunpack.c.l.s4 1966171168
        %v345 = vunpack.c.0.s8 %v344
        %v346 = vlaneseq
        %v347 = vshrl.u32 %v346, 7
        %v348 = vsub.s32 %v345, %v347
        %v349 = vrot.slane %v341, %v348
        %v351 = vunpack.c.l.s4 1966171168
        %v352 = vunpack.c.0.s8 %v351
        %v353 = vlaneseq
        %v354 = vshrl.u32 %v353, 7
        %v355 = vsub.s32 %v352, %v354
        %v356 = vrot.slane %v342, %v355
        %v357 = vcombine.high %v349, %v349
        %v359 = vunpack.c.l.s4 1966171168
        %v360 = vunpack.c.0.s8 %v359
        %v361 = vlaneseq
        %v362 = vshrl.u32 %v361, 7
        %v363 = vsub.s32 %v360, %v362
        %v364 = vrot.slane %v202, %v363
        %v365 = vcombine.high %v364, %v364
        %v367 = vunpack.c.l.s4 1966171168
        %v368 = vunpack.c.0.s8 %v367
        %v369 = vlaneseq
        %v370 = vshrl.u32 %v369, 7
        %v371 = vsub.s32 %v368, %v370
        %v372 = vrot.slane %v364, %v371
        %v374 = vunpack.c.l.s4 1966171168
        %v375 = vunpack.c.0.s8 %v374
        %v376 = vlaneseq
        %v377 = vshrl.u32 %v376, 7
        %v378 = vsub.s32 %v375, %v377
        %v379 = vrot.slane %v365, %v378
        %v380 = vcombine.high %v372, %v372
        %v382 = vunpack.c.l.s4 1966171168
        %v383 = vunpack.c.0.s8 %v382
        %v384 = vlaneseq
        %v385 = vshrl.u32 %v384, 7
        %v386 = vsub.s32 %v383, %v385
        %v387 = vrot.slane %v203, %v386
        %v388 = vcombine.high %v387, %v387
        %v390 = vunpack.c.l.s4 1966171168
        %v391 = vunpack.c.0.s8 %v390
        %v392 = vlaneseq
        %v393 = vshrl.u32 %v392, 7
        %v394 = vsub.s32 %v391, %v393
        %v395 = vrot.slane %v387, %v394
        %v397 = vunpack.c.l.s4 1966171168
        %v398 = vunpack.c.0.s8 %v397
        %v399 = vlaneseq
        %v400 = vshrl.u32 %v399, 7
        %v401 = vsub.s32 %v398, %v400
        %v402 = vrot.slane %v388, %v401
        %v403 = vcombine.high %v395, %v395
        %v404 = vunpack.c.l.b16 %v234
        %v405 = vunpack.c.l.b16 %v241
        %v406 = vunpack.c.l.b16 %v242
        %v407 = vunpack.c.l.b16 %v257
        %v408 = vunpack.c.l.b16 %v264
        %v409 = vunpack.c.l.b16 %v265
        %v410 = vunpack.c.l.b16 %v280
        %v411 = vunpack.c.l.b16 %v287
        %v412 = vunpack.c.l.b16 %v288
        %v413 = vunpack.c.l.b16 %v303
        %v414 = vunpack.c.l.b16 %v310
        %v415 = vunpack.c.l.b16 %v311
        %v416 = vunpack.c.l.b16 %v326
        %v417 = vunpack.c.l.b16 %v333
        %v418 = vunpack.c.l.b16 %v334
        %v419 = vunpack.c.l.b16 %v349
        %v420 = vunpack.c.l.b16 %v356
        %v421 = vunpack.c.l.b16 %v357
        %v422 = vunpack.c.l.b16 %v372
        %v423 = vunpack.c.l.b16 %v379
        %v424 = vunpack.c.l.b16 %v380
        %v425 = vunpack.c.l.b16 %v395
        %v426 = vunpack.c.l.b16 %v402
        %v427 = vunpack.c.l.b16 %v403
        %v428 = vrot.slane %v407, 7
        %vm429 = vcmask 1041409
        %v430 = vsel %vm429, %v428, %v404
        %v431 = vrot.slane %v410, 6
        %vm432 = vcmask 1042434
        %v433 = vsel %vm432, %v431, %v430
        %v434 = vrot.slane %v413, 5
        %vm435 = vcmask 1043459
        %v436 = vsel %vm435, %v434, %v433
        %v437 = vrot.slane %v416, 4
        %vm438 = vcmask 1044484
        %v439 = vsel %vm438, %v437, %v436
        %v440 = vrot.slane %v419, 3
        %vm441 = vcmask 1045509
        %v442 = vsel %vm441, %v440, %v439
        %v443 = vrot.slane %v422, 2
        %vm444 = vcmask 1046534
        %v445 = vsel %vm444, %v443, %v442
        %v446 = vrot.slane %v425, 1
        %vm447 = vcmask 1047559
        %v448 = vsel %vm447, %v446, %v445
        %v449 = vrot.slane %v408, 7
        %v450 = vsel %vm429, %v449, %v405
        %v451 = vrot.slane %v411, 6
        %v452 = vsel %vm432, %v451, %v450
        %v453 = vrot.slane %v414, 5
        %v454 = vsel %vm435, %v453, %v452
        %v455 = vrot.slane %v417, 4
        %v456 = vsel %vm438, %v455, %v454
        %v457 = vrot.slane %v420, 3
        %v458 = vsel %vm441, %v457, %v456
        %v459 = vrot.slane %v423, 2
        %v460 = vsel %vm444, %v459, %v458
        %v461 = vrot.slane %v426, 1
        %v462 = vsel %vm447, %v461, %v460
        %v463 = vrot.slane %v409, 7
        %v464 = vsel %vm429, %v463, %v406
        %v465 = vrot.slane %v412, 6
        %v466 = vsel %vm432, %v465, %v464
        %v467 = vrot.slane %v415, 5
        %v468 = vsel %vm435, %v467, %v466
        %v469 = vrot.slane %v418, 4
        %v470 = vsel %vm438, %v469, %v468
        %v471 = vrot.slane %v421, 3
        %v472 = vsel %vm441, %v471, %v470
        %v473 = vrot.slane %v424, 2
        %v474 = vsel %vm444, %v473, %v472
        %v475 = vrot.slane %v427, 1
        %v476 = vsel %vm447, %v475, %v474
        %v477 = vpack.c.b16 %v448, %v448
        %v478 = vpack.c.b16 %v462, %v462
        %v479 = vpack.c.b16 %v476, %v476
        %v489 = vunpack.c.l.s4 1966171168
        %v490 = vunpack.c.0.s8 %v489
        %v491 = vlaneseq
        %v492 = vshrl.u32 %v491, 7
        %v493 = vsub.s32 %v490, %v492
        %v494 = vrot.slane %v204, %v493
        %v495 = vcombine.high %v494, %v494
        %v497 = vunpack.c.l.s4 1966171168
        %v498 = vunpack.c.0.s8 %v497
        %v499 = vlaneseq
        %v500 = vshrl.u32 %v499, 7
        %v501 = vsub.s32 %v498, %v500
        %v502 = vrot.slane %v494, %v501
        %v504 = vunpack.c.l.s4 1966171168
        %v505 = vunpack.c.0.s8 %v504
        %v506 = vlaneseq
        %v507 = vshrl.u32 %v506, 7
        %v508 = vsub.s32 %v505, %v507
        %v509 = vrot.slane %v495, %v508
        %v510 = vcombine.low %v502, %v502
        %v511 = vcombine.low %v509, %v509
        %v513 = vunpack.c.l.s4 1966171168
        %v514 = vunpack.c.0.s8 %v513
        %v515 = vlaneseq
        %v516 = vshrl.u32 %v515, 7
        %v517 = vsub.s32 %v514, %v516
        %v518 = vrot.slane %v205, %v517
        %v519 = vcombine.high %v518, %v518
        %v521 = vunpack.c.l.s4 1966171168
        %v522 = vunpack.c.0.s8 %v521
        %v523 = vlaneseq
        %v524 = vshrl.u32 %v523, 7
        %v525 = vsub.s32 %v522, %v524
        %v526 = vrot.slane %v518, %v525
        %v528 = vunpack.c.l.s4 1966171168
        %v529 = vunpack.c.0.s8 %v528
        %v530 = vlaneseq
        %v531 = vshrl.u32 %v530, 7
        %v532 = vsub.s32 %v529, %v531
        %v533 = vrot.slane %v519, %v532
        %v534 = vcombine.low %v526, %v526
        %v535 = vcombine.low %v533, %v533
        %v537 = vunpack.c.l.s4 1966171168
        %v538 = vunpack.c.0.s8 %v537
        %v539 = vlaneseq
        %v540 = vshrl.u32 %v539, 7
        %v541 = vsub.s32 %v538, %v540
        %v542 = vrot.slane %v206, %v541
        %v543 = vcombine.high %v542, %v542
        %v545 = vunpack.c.l.s4 1966171168
        %v546 = vunpack.c.0.s8 %v545
        %v547 = vlaneseq
        %v548 = vshrl.u32 %v547, 7
        %v549 = vsub.s32 %v546, %v548
        %v550 = vrot.slane %v542, %v549
        %v552 = vunpack.c.l.s4 1966171168
        %v553 = vunpack.c.0.s8 %v552
        %v554 = vlaneseq
        %v555 = vshrl.u32 %v554, 7
        %v556 = vsub.s32 %v553, %v555
        %v557 = vrot.slane %v543, %v556
        %v558 = vcombine.low %v550, %v550
        %v559 = vcombine.low %v557, %v557
        %v561 = vunpack.c.l.s4 1966171168
        %v562 = vunpack.c.0.s8 %v561
        %v563 = vlaneseq
        %v564 = vshrl.u32 %v563, 7
        %v565 = vsub.s32 %v562, %v564
        %v566 = vrot.slane %v207, %v565
        %v567 = vcombine.high %v566, %v566
        %v569 = vunpack.c.l.s4 1966171168
        %v570 = vunpack.c.0.s8 %v569
        %v571 = vlaneseq
        %v572 = vshrl.u32 %v571, 7
        %v573 = vsub.s32 %v570, %v572
        %v574 = vrot.slane %v566, %v573
        %v576 = vunpack.c.l.s4 1966171168
        %v577 = vunpack.c.0.s8 %v576
        %v578 = vlaneseq
        %v579 = vshrl.u32 %v578, 7
        %v580 = vsub.s32 %v577, %v579
        %v581 = vrot.slane %v567, %v580
        %v582 = vcombine.low %v574, %v574
        %v583 = vcombine.low %v581, %v581
        %v585 = vunpack.c.l.s4 1966171168
        %v586 = vunpack.c.0.s8 %v585
        %v587 = vlaneseq
        %v588 = vshrl.u32 %v587, 7
        %v589 = vsub.s32 %v586, %v588
        %v590 = vrot.slane %v208, %v589
        %v591 = vcombine.high %v590, %v590
        %v593 = vunpack.c.l.s4 1966171168
        %v594 = vunpack.c.0.s8 %v593
        %v595 = vlaneseq
        %v596 = vshrl.u32 %v595, 7
        %v597 = vsub.s32 %v594, %v596
        %v598 = vrot.slane %v590, %v597
        %v600 = vunpack.c.l.s4 1966171168
        %v601 = vunpack.c.0.s8 %v600
        %v602 = vlaneseq
        %v603 = vshrl.u32 %v602, 7
        %v604 = vsub.s32 %v601, %v603
        %v605 = vrot.slane %v591, %v604
        %v606 = vcombine.low %v598, %v598
        %v607 = vcombine.low %v605, %v605
        %v609 = vunpack.c.l.s4 1966171168
        %v610 = vunpack.c.0.s8 %v609
        %v611 = vlaneseq
        %v612 = vshrl.u32 %v611, 7
        %v613 = vsub.s32 %v610, %v612
        %v614 = vrot.slane %v209, %v613
        %v615 = vcombine.high %v614, %v614
        %v617 = vunpack.c.l.s4 1966171168
        %v618 = vunpack.c.0.s8 %v617
        %v619 = vlaneseq
        %v620 = vshrl.u32 %v619, 7
        %v621 = vsub.s32 %v618, %v620
        %v622 = vrot.slane %v614, %v621
        %v624 = vunpack.c.l.s4 1966171168
        %v625 = vunpack.c.0.s8 %v624
        %v626 = vlaneseq
        %v627 = vshrl.u32 %v626, 7
        %v628 = vsub.s32 %v625, %v627
        %v629 = vrot.slane %v615, %v628
        %v630 = vcombine.low %v622, %v622
        %v631 = vcombine.low %v629, %v629
        %v633 = vunpack.c.l.s4 1966171168
        %v634 = vunpack.c.0.s8 %v633
        %v635 = vlaneseq
        %v636 = vshrl.u32 %v635, 7
        %v637 = vsub.s32 %v634, %v636
        %v638 = vrot.slane %v210, %v637
        %v639 = vcombine.high %v638, %v638
        %v641 = vunpack.c.l.s4 1966171168
        %v642 = vunpack.c.0.s8 %v641
        %v643 = vlaneseq
        %v644 = vshrl.u32 %v643, 7
        %v645 = vsub.s32 %v642, %v644
        %v646 = vrot.slane %v638, %v645
        %v648 = vunpack.c.l.s4 1966171168
        %v649 = vunpack.c.0.s8 %v648
        %v650 = vlaneseq
        %v651 = vshrl.u32 %v650, 7
        %v652 = vsub.s32 %v649, %v651
        %v653 = vrot.slane %v639, %v652
        %v654 = vcombine.low %v646, %v646
        %v655 = vcombine.low %v653, %v653
        %v657 = vunpack.c.l.s4 1966171168
        %v658 = vunpack.c.0.s8 %v657
        %v659 = vlaneseq
        %v660 = vshrl.u32 %v659, 7
        %v661 = vsub.s32 %v658, %v660
        %v662 = vrot.slane %v211, %v661
        %v663 = vcombine.high %v662, %v662
        %v665 = vunpack.c.l.s4 1966171168
        %v666 = vunpack.c.0.s8 %v665
        %v667 = vlaneseq
        %v668 = vshrl.u32 %v667, 7
        %v669 = vsub.s32 %v666, %v668
        %v670 = vrot.slane %v662, %v669
        %v672 = vunpack.c.l.s4 1966171168
        %v673 = vunpack.c.0.s8 %v672
        %v674 = vlaneseq
        %v675 = vshrl.u32 %v674, 7
        %v676 = vsub.s32 %v673, %v675
        %v677 = vrot.slane %v663, %v676
        %v678 = vcombine.low %v670, %v670
        %v679 = vcombine.low %v677, %v677
        %v680 = vunpack.c.h.b16 %v510
        %v681 = vunpack.c.h.b16 %v511
        %v682 = vunpack.c.h.b16 %v502
        %v683 = vunpack.c.h.b16 %v509
        %v684 = vunpack.c.h.b16 %v534
        %v685 = vunpack.c.h.b16 %v535
        %v686 = vunpack.c.h.b16 %v526
        %v687 = vunpack.c.h.b16 %v533
        %v688 = vunpack.c.h.b16 %v558
        %v689 = vunpack.c.h.b16 %v559
        %v690 = vunpack.c.h.b16 %v550
        %v691 = vunpack.c.h.b16 %v557
        %v692 = vunpack.c.h.b16 %v582
        %v693 = vunpack.c.h.b16 %v583
        %v694 = vunpack.c.h.b16 %v574
        %v695 = vunpack.c.h.b16 %v581
        %v696 = vunpack.c.h.b16 %v606
        %v697 = vunpack.c.h.b16 %v607
        %v698 = vunpack.c.h.b16 %v598
        %v699 = vunpack.c.h.b16 %v605
        %v700 = vunpack.c.h.b16 %v630
        %v701 = vunpack.c.h.b16 %v631
        %v702 = vunpack.c.h.b16 %v622
        %v703 = vunpack.c.h.b16 %v629
        %v704 = vunpack.c.h.b16 %v654
        %v705 = vunpack.c.h.b16 %v655
        %v706 = vunpack.c.h.b16 %v646
        %v707 = vunpack.c.h.b16 %v653
        %v708 = vunpack.c.h.b16 %v678
        %v709 = vunpack.c.h.b16 %v679
        %v710 = vunpack.c.h.b16 %v670
        %v711 = vunpack.c.h.b16 %v677
        %v712 = vrot.slane %v684, 7
        %v713 = vsel %vm429, %v712, %v680
        %v714 = vrot.slane %v688, 6
        %v715 = vsel %vm432, %v714, %v713
        %v716 = vrot.slane %v692, 5
        %v717 = vsel %vm435, %v716, %v715
        %v718 = vrot.slane %v696, 4
        %v719 = vsel %vm438, %v718, %v717
        %v720 = vrot.slane %v700, 3
        %v721 = vsel %vm441, %v720, %v719
        %v722 = vrot.slane %v704, 2
        %v723 = vsel %vm444, %v722, %v721
        %v724 = vrot.slane %v708, 1
        %v725 = vsel %vm447, %v724, %v723
        %v726 = vrot.slane %v685, 7
        %v727 = vsel %vm429, %v726, %v681
        %v728 = vrot.slane %v689, 6
        %v729 = vsel %vm432, %v728, %v727
        %v730 = vrot.slane %v693, 5
        %v731 = vsel %vm435, %v730, %v729
        %v732 = vrot.slane %v697, 4
        %v733 = vsel %vm438, %v732, %v731
        %v734 = vrot.slane %v701, 3
        %v735 = vsel %vm441, %v734, %v733
        %v736 = vrot.slane %v705, 2
        %v737 = vsel %vm444, %v736, %v735
        %v738 = vrot.slane %v709, 1
        %v739 = vsel %vm447, %v738, %v737
        %v740 = vrot.slane %v686, 7
        %v741 = vsel %vm429, %v740, %v682
        %v742 = vrot.slane %v690, 6
        %v743 = vsel %vm432, %v742, %v741
        %v744 = vrot.slane %v694, 5
        %v745 = vsel %vm435, %v744, %v743
        %v746 = vrot.slane %v698, 4
        %v747 = vsel %vm438, %v746, %v745
        %v748 = vrot.slane %v702, 3
        %v749 = vsel %vm441, %v748, %v747
        %v750 = vrot.slane %v706, 2
        %v751 = vsel %vm444, %v750, %v749
        %v752 = vrot.slane %v710, 1
        %v753 = vsel %vm447, %v752, %v751
        %v754 = vrot.slane %v687, 7
        %v755 = vsel %vm429, %v754, %v683
        %v756 = vrot.slane %v691, 6
        %v757 = vsel %vm432, %v756, %v755
        %v758 = vrot.slane %v695, 5
        %v759 = vsel %vm435, %v758, %v757
        %v760 = vrot.slane %v699, 4
        %v761 = vsel %vm438, %v760, %v759
        %v762 = vrot.slane %v703, 3
        %v763 = vsel %vm441, %v762, %v761
        %v764 = vrot.slane %v707, 2
        %v765 = vsel %vm444, %v764, %v763
        %v766 = vrot.slane %v711, 1
        %v767 = vsel %vm447, %v766, %v765
        %v768 = vpack.c.b16 %v725, %v725
        %v769 = vpack.c.b16 %v739, %v739
        %v770 = vpack.c.b16 %v753, %v753
        %v771 = vpack.c.b16 %v767, %v767
        %772 = vrot.lane.b32.xlu0 %v768, 127
        %v773 = vpop.permute.xlu0 %772
        %774 = vrot.lane.b32.xlu0 %v769, 127
        %v775 = vpop.permute.xlu0 %774
        %776 = vrot.lane.b32.xlu0 %v770, 127
        %v777 = vpop.permute.xlu0 %776
        %778 = vrot.lane.b32.xlu0 %v771, 127
        %v779 = vpop.permute.xlu0 %778
        %vm780 = vcmask 1039360
        %v781 = vsel %vm780, %v773, %v775
        %v782 = vsel %vm780, %v775, %v777
        %v783 = vsel %vm780, %v777, %v779
        %v784 = vcombine.high %v502, %v502
        %v785 = vcombine.high %v509, %v509
        %v786 = vcombine.high %v526, %v526
        %v787 = vcombine.high %v533, %v533
        %v788 = vcombine.high %v550, %v550
        %v789 = vcombine.high %v557, %v557
        %v790 = vcombine.high %v574, %v574
        %v791 = vcombine.high %v581, %v581
        %v792 = vcombine.high %v598, %v598
        %v793 = vcombine.high %v605, %v605
        %v794 = vcombine.high %v622, %v622
        %v795 = vcombine.high %v629, %v629
        %v796 = vcombine.high %v646, %v646
        %v797 = vcombine.high %v653, %v653
        %v798 = vcombine.high %v670, %v670
        %v799 = vcombine.high %v677, %v677
        %v800 = vunpack.c.l.b16 %v502
        %v801 = vunpack.c.l.b16 %v509
        %v802 = vunpack.c.l.b16 %v784
        %v803 = vunpack.c.l.b16 %v785
        %v804 = vunpack.c.l.b16 %v526
        %v805 = vunpack.c.l.b16 %v533
        %v806 = vunpack.c.l.b16 %v786
        %v807 = vunpack.c.l.b16 %v787
        %v808 = vunpack.c.l.b16 %v550
        %v809 = vunpack.c.l.b16 %v557
        %v810 = vunpack.c.l.b16 %v788
        %v811 = vunpack.c.l.b16 %v789
        %v812 = vunpack.c.l.b16 %v574
        %v813 = vunpack.c.l.b16 %v581
        %v814 = vunpack.c.l.b16 %v790
        %v815 = vunpack.c.l.b16 %v791
        %v816 = vunpack.c.l.b16 %v598
        %v817 = vunpack.c.l.b16 %v605
        %v818 = vunpack.c.l.b16 %v792
        %v819 = vunpack.c.l.b16 %v793
        %v820 = vunpack.c.l.b16 %v622
        %v821 = vunpack.c.l.b16 %v629
        %v822 = vunpack.c.l.b16 %v794
        %v823 = vunpack.c.l.b16 %v795
        %v824 = vunpack.c.l.b16 %v646
        %v825 = vunpack.c.l.b16 %v653
        %v826 = vunpack.c.l.b16 %v796
        %v827 = vunpack.c.l.b16 %v797
        %v828 = vunpack.c.l.b16 %v670
        %v829 = vunpack.c.l.b16 %v677
        %v830 = vunpack.c.l.b16 %v798
        %v831 = vunpack.c.l.b16 %v799
        %v832 = vrot.slane %v804, 7
        %v833 = vsel %vm429, %v832, %v800
        %v834 = vrot.slane %v808, 6
        %v835 = vsel %vm432, %v834, %v833
        %v836 = vrot.slane %v812, 5
        %v837 = vsel %vm435, %v836, %v835
        %v838 = vrot.slane %v816, 4
        %v839 = vsel %vm438, %v838, %v837
        %v840 = vrot.slane %v820, 3
        %v841 = vsel %vm441, %v840, %v839
        %v842 = vrot.slane %v824, 2
        %v843 = vsel %vm444, %v842, %v841
        %v844 = vrot.slane %v828, 1
        %v845 = vsel %vm447, %v844, %v843
        %v846 = vrot.slane %v805, 7
        %v847 = vsel %vm429, %v846, %v801
        %v848 = vrot.slane %v809, 6
        %v849 = vsel %vm432, %v848, %v847
        %v850 = vrot.slane %v813, 5
        %v851 = vsel %vm435, %v850, %v849
        %v852 = vrot.slane %v817, 4
        %v853 = vsel %vm438, %v852, %v851
        %v854 = vrot.slane %v821, 3
        %v855 = vsel %vm441, %v854, %v853
        %v856 = vrot.slane %v825, 2
        %v857 = vsel %vm444, %v856, %v855
        %v858 = vrot.slane %v829, 1
        %v859 = vsel %vm447, %v858, %v857
        %v860 = vrot.slane %v806, 7
        %v861 = vsel %vm429, %v860, %v802
        %v862 = vrot.slane %v810, 6
        %v863 = vsel %vm432, %v862, %v861
        %v864 = vrot.slane %v814, 5
        %v865 = vsel %vm435, %v864, %v863
        %v866 = vrot.slane %v818, 4
        %v867 = vsel %vm438, %v866, %v865
        %v868 = vrot.slane %v822, 3
        %v869 = vsel %vm441, %v868, %v867
        %v870 = vrot.slane %v826, 2
        %v871 = vsel %vm444, %v870, %v869
        %v872 = vrot.slane %v830, 1
        %v873 = vsel %vm447, %v872, %v871
        %v874 = vrot.slane %v807, 7
        %v875 = vsel %vm429, %v874, %v803
        %v876 = vrot.slane %v811, 6
        %v877 = vsel %vm432, %v876, %v875
        %v878 = vrot.slane %v815, 5
        %v879 = vsel %vm435, %v878, %v877
        %v880 = vrot.slane %v819, 4
        %v881 = vsel %vm438, %v880, %v879
        %v882 = vrot.slane %v823, 3
        %v883 = vsel %vm441, %v882, %v881
        %v884 = vrot.slane %v827, 2
        %v885 = vsel %vm444, %v884, %v883
        %v886 = vrot.slane %v831, 1
        %v887 = vsel %vm447, %v886, %v885
        %v888 = vpack.c.b16 %v845, %v845
        %v889 = vpack.c.b16 %v859, %v859
        %v890 = vpack.c.b16 %v873, %v873
        %v891 = vpack.c.b16 %v887, %v887
        %892 = vrot.lane.b32.xlu0 %v888, 126
        %v893 = vpop.permute.xlu0 %892
        %894 = vrot.lane.b32.xlu0 %v889, 126
        %v895 = vpop.permute.xlu0 %894
        %896 = vrot.lane.b32.xlu0 %v890, 126
        %v897 = vpop.permute.xlu0 %896
        %898 = vrot.lane.b32.xlu0 %v891, 126
        %v899 = vpop.permute.xlu0 %898
        %vm900 = vcmask 1031168
        %v901 = vsel %vm900, %v893, %v895
        %v902 = vsel %vm900, %v895, %v897
        %v903 = vsel %vm900, %v897, %v899
        %904 = vrot.lane.b32.xlu0 %v768, 110
        %v905 = vpop.permute.xlu0 %904
        %906 = vrot.lane.b32.xlu0 %v769, 110
        %v907 = vpop.permute.xlu0 %906
        %908 = vrot.lane.b32.xlu0 %v770, 110
        %v909 = vpop.permute.xlu0 %908
        %910 = vrot.lane.b32.xlu0 %v771, 110
        %v911 = vpop.permute.xlu0 %910
        %vm912 = vcmask 900096
        %v913 = vsel %vm912, %v905, %v907
        %v914 = vsel %vm912, %v907, %v909
        %v915 = vsel %vm912, %v909, %v911
        %916 = vrot.lane.b32.xlu0 %v888, 109
        %v917 = vpop.permute.xlu0 %916
        %918 = vrot.lane.b32.xlu0 %v889, 109
        %v919 = vpop.permute.xlu0 %918
        %920 = vrot.lane.b32.xlu0 %v890, 109
        %v921 = vpop.permute.xlu0 %920
        %922 = vrot.lane.b32.xlu0 %v891, 109
        %v923 = vpop.permute.xlu0 %922
        %vm924 = vcmask 891904
        %v925 = vsel %vm924, %v917, %v919
        %v926 = vsel %vm924, %v919, %v921
        %v927 = vsel %vm924, %v921, %v923
        %928 = vrot.lane.b32.xlu0 %v768, 108
        %v929 = vpop.permute.xlu0 %928
        %930 = vrot.lane.b32.xlu0 %v769, 108
        %v931 = vpop.permute.xlu0 %930
        %932 = vrot.lane.b32.xlu0 %v770, 108
        %v933 = vpop.permute.xlu0 %932
        %934 = vrot.lane.b32.xlu0 %v771, 108
        %v935 = vpop.permute.xlu0 %934
        %vm936 = vcmask 883712
        %v937 = vsel %vm936, %v929, %v931
        %v938 = vsel %vm936, %v931, %v933
        %v939 = vsel %vm936, %v933, %v935
        %940 = vrot.lane.b32.xlu0 %v888, 92
        %v941 = vpop.permute.xlu0 %940
        %942 = vrot.lane.b32.xlu0 %v889, 92
        %v943 = vpop.permute.xlu0 %942
        %944 = vrot.lane.b32.xlu0 %v890, 92
        %v945 = vpop.permute.xlu0 %944
        %946 = vrot.lane.b32.xlu0 %v891, 92
        %v947 = vpop.permute.xlu0 %946
        %vm948 = vcmask 752640
        %v949 = vsel %vm948, %v941, %v943
        %v950 = vsel %vm948, %v943, %v945
        %v951 = vsel %vm948, %v945, %v947
        %952 = vrot.lane.b32.xlu0 %v768, 91
        %v953 = vpop.permute.xlu0 %952
        %954 = vrot.lane.b32.xlu0 %v769, 91
        %v955 = vpop.permute.xlu0 %954
        %956 = vrot.lane.b32.xlu0 %v770, 91
        %v957 = vpop.permute.xlu0 %956
        %958 = vrot.lane.b32.xlu0 %v771, 91
        %v959 = vpop.permute.xlu0 %958
        %vm960 = vcmask 744448
        %v961 = vsel %vm960, %v953, %v955
        %v962 = vsel %vm960, %v955, %v957
        %v963 = vsel %vm960, %v957, %v959
        %964 = vrot.lane.b32.xlu0 %v888, 90
        %v965 = vpop.permute.xlu0 %964
        %966 = vrot.lane.b32.xlu0 %v889, 90
        %v967 = vpop.permute.xlu0 %966
        %968 = vrot.lane.b32.xlu0 %v890, 90
        %v969 = vpop.permute.xlu0 %968
        %970 = vrot.lane.b32.xlu0 %v891, 90
        %v971 = vpop.permute.xlu0 %970
        %vm972 = vcmask 736256
        %v973 = vsel %vm972, %v965, %v967
        %v974 = vsel %vm972, %v967, %v969
        %v975 = vsel %vm972, %v969, %v971
        %vm976 = vcmask 1043456
        %v979 = vsel %vm976, %v477, %v781
        %v983 = vsel %vm976, %v478, %v782
        %v987 = vsel %vm976, %v479, %v783
        %v991 = vsel %vm976, %v901, %v913
        %v995 = vsel %vm976, %v902, %v914
        %v999 = vsel %vm976, %v903, %v915
        %v1003 = vsel %vm976, %v925, %v937
        %v1007 = vsel %vm976, %v926, %v938
        %v1011 = vsel %vm976, %v927, %v939
        %v1015 = vsel %vm976, %v949, %v961
        %v1019 = vsel %vm976, %v950, %v962
        %v1023 = vsel %vm976, %v951, %v963
        %v1025 = vld [vmem:[%s1] sm:$0xf]
        %v1026 = vld [vmem:[%s1 + $0x4] sm:$0xf]
        %v1027 = vld [vmem:[%s1 + $0x8] sm:$0xf]
        %v1028 = vld [vmem:[%s1 + $0xc] sm:$0xf]
        %v1029 = vld [vmem:[%s2] sm:$0xff]
        %v1030 = vld [vmem:[%s2 + $0x8] sm:$0xff]
        %v1031 = vld [vmem:[%s2 + $0x10] sm:$0xff]
        %v1032 = vld [vmem:[%s2 + $0x18] sm:$0xff]
        %1034 = vset.pattern.permute.xlu0 0
        %1035 = vperm.xlu0 %1034, %v1029
        %v1036 = vpop.permute.xlu0 %1035
        %1039 = vset.pattern.permute.xlu0 0
        %1040 = vperm.xlu0 %1039, %v1030
        %v1041 = vpop.permute.xlu0 %1040
        %1044 = vset.pattern.permute.xlu0 0
        %1045 = vperm.xlu0 %1044, %v1031
        %v1046 = vpop.permute.xlu0 %1045
        %1049 = vset.pattern.permute.xlu0 0
        %1050 = vperm.xlu0 %1049, %v1032
        %v1051 = vpop.permute.xlu0 %1050
        %v1057 = vunpack.c.l.b16 %v1025
        %v1058 = vunpack.c.l.b16 %v1026
        %v1059 = vunpack.c.l.b16 %v1027
        %v1060 = vunpack.c.l.b16 %v1028
        %v1061 = vpack.c.b16 %v1058, %v1057
        %v1062 = vpack.c.b16 %v1060, %v1059
        %vm1063 = vcmask 588800
        %v1065 = vsel %vm1063, %v1061, 0
        %v1068 = vsel %vm1063, %v1062, 0
        %v1071 = vsel %vm976, %v973, 0
        %v1074 = vsel %vm976, %v974, 0
        %v1077 = vsel %vm976, %v975, 0
        %1079 = vmatprep.subr.bf16.mxu0 %v983
        %1080 = vmatpush1.bf16.msra.mxu0 %v979
        %1081 = vmatprep.subr.bf16.mxu0 %v995
        %1082 = vmatpush1.bf16.msra.mxu0 %v991
        %1083 = vmatprep.subr.bf16.mxu0 %v1007
        %1084 = vmatpush1.bf16.msra.mxu0 %v1003
        %1085 = vmatprep.subr.bf16.mxu0 %v1019
        %1086 = vmatpush1.bf16.msra.mxu0 %v1015
        %1087 = vmatprep.subr.bf16.mxu0 %v1074
        %1088 = vmatpush1.bf16.msra.mxu0 %v1071
        %1089 = vmatprep.subr.bf16.mxu0 0
        %1090 = vmatpush1.bf16.msra.mxu0 0
        %1091 = vmatprep.subr.bf16.mxu0 0
        %1092 = vmatpush1.bf16.msra.mxu0 0
        %1093 = vmatprep.subr.bf16.mxu0 0
        %1094 = vmatpush1.bf16.msra.mxu0 0
        %1095 = vmatprep.subr.bf16.mxu0 0
        %1096 = vmatpush1.bf16.msra.mxu0 0
        %1097 = vmatprep.subr.bf16.mxu0 0
        %1098 = vmatpush1.bf16.msra.mxu0 0
        %1099 = vmatprep.subr.bf16.mxu0 0
        %1100 = vmatpush1.bf16.msra.mxu0 0
        %1101 = vmatprep.subr.bf16.mxu0 0
        %1102 = vmatpush1.bf16.msra.mxu0 0
        %1103 = vmatprep.subr.bf16.mxu0 0
        %1104 = vmatpush1.bf16.msra.mxu0 0
        %1105 = vmatprep.subr.bf16.mxu0 0
        %1106 = vmatpush1.bf16.msra.mxu0 0
        %1107 = vmatprep.subr.bf16.mxu0 0
        %1108 = vmatpush1.bf16.msra.mxu0 0
        %1109 = vmatprep.subr.bf16.mxu0 0
        %1110 = vmatpush1.bf16.msra.mxu0 0
        %1111 = vmatprep.mubr.bf16.mxu0 0
        %1112 = vmatmul.mubr.bf16.gmra.mrb[0].mxu0 %v1065
        %v1113 = vpop.f32.mrb[0].mxu0
        %v1114 = vadd.f32 %v1036, %v1113
        %v1115 = vpop.f32.mrb[0].mxu0
        %v1116 = vadd.f32 %v1036, %v1115
        %v1117 = vpop.f32.mrb[0].mxu0
        %v1118 = vadd.f32 %v1041, %v1117
        %v1119 = vpop.f32.mrb[0].mxu0
        %v1120 = vadd.f32 %v1041, %v1119
        %1121 = vmatprep.mubr.bf16.mxu0 0
        %1122 = vmatmul.mubr.bf16.gmra.mrb[0].mxu0 %v1068
        %v1123 = vpop.f32.mrb[0].mxu0
        %v1124 = vadd.f32 %v1046, %v1123
        %v1125 = vpop.f32.mrb[0].mxu0
        %v1126 = vadd.f32 %v1046, %v1125
        %v1127 = vpop.f32.mrb[0].mxu0
        %v1128 = vadd.f32 %v1051, %v1127
        %v1129 = vpop.f32.mrb[0].mxu0
        %v1130 = vadd.f32 %v1051, %v1129
        %1131 = vdwg.mxu0
        %1132 = vmatprep.subr.bf16.mxu0 0
        %1133 = vmatpush1.bf16.msra.mxu0 %v987
        %1134 = vmatprep.subr.bf16.mxu0 0
        %1135 = vmatpush1.bf16.msra.mxu0 %v999
        %1136 = vmatprep.subr.bf16.mxu0 0
        %1137 = vmatpush1.bf16.msra.mxu0 %v1011
        %1138 = vmatprep.subr.bf16.mxu0 0
        %1139 = vmatpush1.bf16.msra.mxu0 %v1023
        %1140 = vmatprep.subr.bf16.mxu0 0
        %1141 = vmatpush1.bf16.msra.mxu0 %v1077
        %1142 = vmatprep.subr.bf16.mxu0 0
        %1143 = vmatpush1.bf16.msra.mxu0 0
        %1144 = vmatprep.subr.bf16.mxu0 0
        %1145 = vmatpush1.bf16.msra.mxu0 0
        %1146 = vmatprep.subr.bf16.mxu0 0
        %1147 = vmatpush1.bf16.msra.mxu0 0
        %1148 = vmatprep.subr.bf16.mxu0 0
        %1149 = vmatpush1.bf16.msra.mxu0 0
        %1150 = vmatprep.subr.bf16.mxu0 0
        %1151 = vmatpush1.bf16.msra.mxu0 0
        %1152 = vmatprep.subr.bf16.mxu0 0
        %1153 = vmatpush1.bf16.msra.mxu0 0
        %1154 = vmatprep.subr.bf16.mxu0 0
        %1155 = vmatpush1.bf16.msra.mxu0 0
        %1156 = vmatprep.subr.bf16.mxu0 0
        %1157 = vmatpush1.bf16.msra.mxu0 0
        %1158 = vmatprep.subr.bf16.mxu0 0
        %1159 = vmatpush1.bf16.msra.mxu0 0
        %1160 = vmatprep.subr.bf16.mxu0 0
        %1161 = vmatpush1.bf16.msra.mxu0 0
        %1162 = vmatprep.subr.bf16.mxu0 0
        %1163 = vmatpush1.bf16.msra.mxu0 0
        %1164 = vmatprep.mubr.bf16.mxu0 0
        %1165 = vmatmul.mubr.bf16.gmra.mrb[0].mxu0 %v1065
        %v1166 = vpop.f32.mrb[0].mxu0
        %v1167 = vadd.f32 %v1036, %v1166
        %v1168 = vpop.f32.mrb[0].mxu0
        %v1169 = vpop.f32.mrb[0].mxu0
        %v1170 = vadd.f32 %v1041, %v1169
        %v1171 = vpop.f32.mrb[0].mxu0
        %1172 = vmatprep.mubr.bf16.mxu0 0
        %1173 = vmatmul.mubr.bf16.gmra.mrb[0].mxu0 %v1068
        %v1174 = vpop.f32.mrb[0].mxu0
        %v1175 = vadd.f32 %v1046, %v1174
        %v1176 = vpop.f32.mrb[0].mxu0
        %v1177 = vpop.f32.mrb[0].mxu0
        %v1178 = vadd.f32 %v1051, %v1177
        %v1179 = vpop.f32.mrb[0].mxu0
        %1180 = vdwg.mxu0
        %1181 = vst [vmem:[%s185] sm:$0xff] %v1114
        %1182 = vst [vmem:[%s185 + $0x8] sm:$0xff] %v1116
        %1183 = vst [vmem:[%s185 + $0x10] sm:$0xff] %v1167
        %1184 = vst [vmem:[%s185 + $0x18] sm:$0xff] %v1118
        %1185 = vst [vmem:[%s185 + $0x20] sm:$0xff] %v1120
        %1186 = vst [vmem:[%s185 + $0x28] sm:$0xff] %v1170
        %1187 = vst [vmem:[%s185 + $0x30] sm:$0xff] %v1124
        %1188 = vst [vmem:[%s185 + $0x38] sm:$0xff] %v1126
        %1189 = vst [vmem:[%s185 + $0x40] sm:$0xff] %v1175
        %1190 = vst [vmem:[%s185 + $0x48] sm:$0xff] %v1128
        %1191 = vst [vmem:[%s185 + $0x50] sm:$0xff] %v1130
        %1192 = vst [vmem:[%s185 + $0x58] sm:$0xff] %v1178
        %s1193 = sand.u32 %s109, 1
        %s1194 = scalar_lea.sflag [#allocation3], %s1193
        %s1195 = sand.u32 %s109, 1
        %s1196 = smul.addr %s1195, 96
        %s1197 = scalar_lea.vmem [#allocation2], %s1196
        // Predicated region
        $region33: #{tpu_custom_call.1} parent=31 // pred_check
          %p1198 = pneg %p119
        $region34: #{tpu_custom_call.1} parent=31 // pred_check_branch
          %1200 = sbr.rel (%p1198) target = $region36
        $region35: #{tpu_custom_call.1} parent=31 // pred_region
          %s1201 = smul.u32 3, %s22
          %s1203 = ssub.s32 1536, 1536
          %1204 = vsyncadd %s1194, %s1203
          %s1205 = smul.addr %s21, 12
          %s1206 = sadd.s32 %s1201, %s1205
          %s1207 = smul.addr %s1206, 128
          %s1208 = scalar_lea.hbm %s3, %s1207
          %s1209 = sshll.u32 %s1197, 4
          %s1210 = int_to_ptr.vmem [resolvable:$true] %s1209
          %1215 = dma.vmem_to_hbm [thread:$0]  %s1210, 1536, %s1208, %s1194, 384, 384, 24
        $region36: #{tpu_custom_call.1} parent=31 // pred_fallthru
          _
      $region32: #{tpu_custom_call.1} parent=5 // pred_fallthru
        _
      %p1216 = scmp.le.s32.totalorder 2, %s12
      // Predicated region
      $region37: #{tpu_custom_call.1} parent=5 // pred_check
        %p1217 = pneg %p1216
      $region38: #{tpu_custom_call.1} parent=5 // pred_check_branch
        %1219 = sbr.rel (%p1217) target = $region40
      $region39: #{tpu_custom_call.1} parent=5 // pred_region
        %s1220 = ssub.s32 %s12, 2
        // Predicated region
        $region41: #{tpu_custom_call.1} parent=39 // pred_check
          %p1221 = pneg %p125
        $region42: #{tpu_custom_call.1} parent=39 // pred_check_branch
          %1223 = sbr.rel (%p1221) target = $region44
        $region43: #{tpu_custom_call.1} parent=39 // pred_region
          %s1224 = sand.u32 %s110, 1
          %s1225 = scalar_lea.sflag [#allocation3], %s1224
          %s1226 = sand.u32 %s110, 1
          %s1227 = smul.addr %s1226, 96
          %s1228 = scalar_lea.vmem [#allocation2], %s1227
          %1229 = dma.done %s1225, 1536
        $region44: #{tpu_custom_call.1} parent=39 // pred_fallthru
          _
      $region40: #{tpu_custom_call.1} parent=5 // pred_fallthru
        _
    $region6: #{tpu_custom_call.1} parent=1 // loop_footer
      %s16 = sadd.s32 1, %s12
    $region7: #{tpu_custom_call.1} parent=1 // loop_footer_branch
      %11 = sbr.rel target = $region3
    $region8: #{tpu_custom_call.1} parent=1 // loop_exit
      _
    %1230 = vsyncpa [#allocation3], 1
    %s1231 = scalar_lea.sflag [#allocation3], 1
    %1232 = vsyncpa %s1231, 1

</llo_original>
